<compile_context>
chip_gen: v5e
topology: v5e:2x2
jax: 0.10.0
libtpu: 0.0.40
codegen_flags: <defaults>
</compile_context>

<pallas_src>
import functools

import jax
import jax.numpy as jnp
from jax.experimental import pallas as pl
from jax.experimental.pallas import tpu as pltpu


def _ce_kernel(x_ref, lbl_ref, valid_ref, out_ref, acc_ref, *,
               s, tl, tiles_per_chunk, inv_total, needs_mask):
    """One (batch b, chunk p, spatial-tile t) grid step.

    x_ref:     (1, C, TL)    logits block (classes on sublanes, spatial on lanes)
    lbl_ref:   (1, 1, TL)    target class per position (native int dtype)
    valid_ref: (1, 1, TL)    validity mask per position (native dtype)
    out_ref:   (1, 1, 1, 1)  per-(batch, chunk) partial: masked-loss-sum / (N*H*W)
    acc_ref:   (1, TL)       f32 vector accumulator (reduced once, at t == last)
    """
    t = pl.program_id(2)

    @pl.when(t == 0)
    def _():
        acc_ref[...] = jnp.zeros_like(acc_ref)

    x = x_ref[0].astype(jnp.float32)             # (C, TL)
    lbl = lbl_ref[0].astype(jnp.int32)           # (1, TL)
    valid = valid_ref[0].astype(jnp.float32)     # (1, TL)

    if needs_mask:
        # Tail-lane mask: lanes at positions >= H*W hold uninitialized data in
        # the last (partial) tile; zero them BEFORE the max/exp and force
        # their validity to 0 so garbage/NaN can never reach the accumulator.
        tile_idx = pl.program_id(1) * tiles_per_chunk + t
        lane = jax.lax.broadcasted_iota(jnp.int32, (1, tl), 1)
        lane_ok = tile_idx * tl + lane < s                                # (1, TL)
        x = jnp.where(lane_ok, x, 0.0)
        valid = jnp.where(lane_ok, valid, 0.0)

    # Numerically stable log-sum-exp over the class (sublane) axis.
    m = jnp.max(x, axis=0, keepdims=True)                                 # (1, TL)
    lse = m + jnp.log(jnp.sum(jnp.exp(x - m), axis=0, keepdims=True))     # (1, TL)

    # Target-class logit via a (C, 1) iota broadcast against the (1, TL) labels
    # (no (C, TL) iota materialized per step).
    cls_ids = jax.lax.broadcasted_iota(jnp.int32, (x.shape[0], 1), 0)     # (C, 1)
    tgt = jnp.sum(jnp.where(cls_ids == lbl, x, 0.0), axis=0, keepdims=True)  # (1, TL)

    # Elementwise accumulation only; the cross-lane reduce is deferred.
    acc_ref[...] += (lse - tgt) * valid

    @pl.when(t == pl.num_programs(2) - 1)
    def _():
        total = jnp.sum(acc_ref[...], axis=-1, keepdims=True)             # (1, 1)
        out_ref[...] = (total * jnp.float32(inv_total)).reshape(1, 1, 1, 1)


def cross_entropy_loss(inputs, labels, cvalid):
    """inputs: (N, C, H, W) logits, labels: (N, H, W) int, cvalid: (N, H, W) float.

    Returns mean over all N*H*W positions of CE(inputs, labels) * cvalid,
    matching `F.cross_entropy(..., reduction='none') * CVaild; loss.mean()`.
    """
    n, c, h, w = inputs.shape
    s = h * w
    m_total = n * s

    # Free views: spatial flattened onto lanes, classes on sublanes. No host
    # padding, no host dtype upcasts.
    x = inputs.reshape(n, c, s)
    lbl = labels.reshape(n, 1, s)
    valid = cvalid.reshape(n, 1, s)

    # ---- VMEM budgeting (accounts for in-kernel f32 temporaries; v7x-safe) --
    try:
        vmem_cap = int(pltpu.get_tpu_info().vmem_capacity_bytes)
    except Exception:  # fall back to the smallest current part (v7x: 64 MiB)
        vmem_cap = 64 * 1024 * 1024
    vmem_limit = min((vmem_cap * 3) // 4, 96 * 1024 * 1024)

    ex = jnp.dtype(inputs.dtype).itemsize
    el = jnp.dtype(labels.dtype).itemsize
    ev = jnp.dtype(cvalid.dtype).itemsize
    # Peak VMEM bytes per lane of tile:
    #   double-buffered inputs (2x) + ~3 f32 (C, TL) in-kernel temporaries
    #   + accumulator and small (1, TL) vectors.
    per_lane = 2 * (c * ex + el + ev) + 3 * c * 4 + 32
    budget = max(1 << 20, vmem_limit - (8 << 20))       # headroom for scratch
    tl = min(65536, (budget // per_lane) // 128 * 128)
    tl = max(tl, 128)
    tl = min(tl, ((s + 127) // 128) * 128)              # never wider than needed

    num_tiles = (s + tl - 1) // tl
    needs_mask = (s % tl) != 0

    # Split the spatial tiles into P parallel chunks so both v7x TensorCores
    # stay busy even when N == 1 (harmless on single-TC v5e/v6e).
    p_split = 2 if (num_tiles % 2 == 0 and num_tiles >= 2) else 1
    tiles_per_chunk = num_tiles // p_split

    kernel = functools.partial(
        _ce_kernel, s=s, tl=tl, tiles_per_chunk=tiles_per_chunk,
        inv_total=1.0 / m_total, needs_mask=needs_mask)

    out = pl.pallas_call(
        kernel,
        out_shape=jax.ShapeDtypeStruct((n, p_split, 1, 1), jnp.float32),
        grid_spec=pltpu.PrefetchScalarGridSpec(
            num_scalar_prefetch=0,
            grid=(n, p_split, tiles_per_chunk),
            in_specs=[
                pl.BlockSpec((1, c, tl),
                             lambda b, p, t: (b, 0, p * tiles_per_chunk + t)),
                pl.BlockSpec((1, 1, tl),
                             lambda b, p, t: (b, 0, p * tiles_per_chunk + t)),
                pl.BlockSpec((1, 1, tl),
                             lambda b, p, t: (b, 0, p * tiles_per_chunk + t)),
            ],
            out_specs=pl.BlockSpec((1, 1, 1, 1), lambda b, p, t: (b, p, 0, 0)),
            scratch_shapes=[pltpu.VMEM((1, tl), jnp.float32)],
        ),
        compiler_params=pltpu.CompilerParams(
            # Batch and chunk axes may be split across TensorCores (v7x);
            # the spatial-tile axis is the sequential reduction.
            dimension_semantics=("parallel", "parallel", "arbitrary"),
            vmem_limit_bytes=vmem_limit,
        ),
    )(x, lbl, valid)

    # Each out[b, p] already holds its chunk's masked-loss sum / (N*H*W).
    return jnp.sum(out)


def _reference(inputs, labels, cvalid):
    # Pure-JAX reference of F.cross_entropy(reduction='none') * mask, then mean.
    x = jnp.transpose(inputs, (0, 2, 3, 1)).astype(jnp.float32)  # (N,H,W,C)
    lse = jax.scipy.special.logsumexp(x, axis=-1)
    tgt = jnp.take_along_axis(x, labels[..., None].astype(jnp.int32), axis=-1)[..., 0]
    loss = (lse - tgt) * cvalid.astype(jnp.float32)
    return jnp.mean(loss)


if __name__ == "__main__":
    key = jax.random.PRNGKey(0)
    k1, k2, k3 = jax.random.split(key, 3)

    N, C, H, W = 2, 4, 16, 16
    inputs = jax.random.normal(k1, (N, C, H, W), dtype=jnp.float32)
    labels = jax.random.randint(k2, (N, H, W), 0, C, dtype=jnp.int32)
    cvalid = (jax.random.uniform(k3, (N, H, W)) > 0.3).astype(jnp.float32)

    out = cross_entropy_loss(inputs, labels, cvalid)
    out = jax.block_until_ready(out)

    ref = _reference(inputs, labels, cvalid)
    assert jnp.allclose(out, ref, rtol=1e-5, atol=1e-5), (out, ref)

    print("KERNEL_OK")
</pallas_src>

<mosaic_0001>
module attributes {stable_mosaic.version = 11 : i64} {
  func.func @_ce_kernel(%arg0: i32, %arg1: i32, %arg2: i32, %arg3: memref<1x4x256xf32, #tpu.memory_space<vmem>>, %arg4: memref<1x1x256xi32, #tpu.memory_space<vmem>>, %arg5: memref<1x1x256xf32, #tpu.memory_space<vmem>>, %arg6: memref<1x1x1x1xf32, #tpu.memory_space<vmem>>, %arg7: memref<1x256xf32, #tpu.memory_space<vmem>>) attributes {dimension_semantics = [#tpu.dimension_semantics<parallel>, #tpu.dimension_semantics<parallel>, #tpu.dimension_semantics<arbitrary>], iteration_bounds = array<i64: 2, 1, 1>, scalar_prefetch = 0 : i64, scratch_operands = 1 : i64, tpu.core_type = #tpu.core_type<tc>, window_params = [{transform_indices = @transform_0, window_bounds = array<i64: 1, 4, 256>}, {transform_indices = @transform_1, window_bounds = array<i64: 1, 1, 256>}, {transform_indices = @transform_2, window_bounds = array<i64: 1, 1, 256>}, {transform_indices = @transform_3, window_bounds = array<i64: 1, 1, 1, 1>}]} {
    %c0_i32 = arith.constant 0 : i32
    %0 = arith.cmpi eq, %arg2, %c0_i32 : i32
    %1 = arith.extui %0 : i1 to i32
    %c0_i32_0 = arith.constant 0 : i32
    %2 = arith.cmpi ne, %1, %c0_i32_0 : i32
    scf.if %2 {
      %cst_18 = arith.constant 0.000000e+00 : f32
      %34 = vector.broadcast %cst_18 : f32 to vector<1x256xf32>
      %c0_19 = arith.constant 0 : index
      %c0_20 = arith.constant 0 : index
      %35 = vector.load %arg7[%c0_19, %c0_20] : memref<1x256xf32, #tpu.memory_space<vmem>>, vector<1x256xf32>
      tpu.vector_store %arg7[%c0_19, %c0_20], %34 {strides = array<i32>} : memref<1x256xf32, #tpu.memory_space<vmem>>, vector<1x256xf32>,
    } else {
    }
    %c0 = arith.constant 0 : index
    %c0_1 = arith.constant 0 : index
    %c0_2 = arith.constant 0 : index
    %3 = vector.load %arg3[%c0, %c0_1, %c0_2] : memref<1x4x256xf32, #tpu.memory_space<vmem>>, vector<1x4x256xf32>
    %4 = vector.shape_cast %3 : vector<1x4x256xf32> to vector<4x256xf32>
    %c0_3 = arith.constant 0 : index
    %c0_4 = arith.constant 0 : index
    %c0_5 = arith.constant 0 : index
    %5 = vector.load %arg4[%c0_3, %c0_4, %c0_5] : memref<1x1x256xi32, #tpu.memory_space<vmem>>, vector<1x1x256xi32>
    %6 = vector.shape_cast %5 : vector<1x1x256xi32> to vector<1x256xi32>
    %c0_6 = arith.constant 0 : index
    %c0_7 = arith.constant 0 : index
    %c0_8 = arith.constant 0 : index
    %7 = vector.load %arg5[%c0_6, %c0_7, %c0_8] : memref<1x1x256xf32, #tpu.memory_space<vmem>>, vector<1x1x256xf32>
    %8 = vector.shape_cast %7 : vector<1x1x256xf32> to vector<1x256xf32>
    %cst = arith.constant dense<0xFF800000> : vector<256xf32>
    %9 = vector.multi_reduction <maximumf>, %4, %cst [0] : vector<4x256xf32> to vector<256xf32>
    %10 = vector.shape_cast %9 : vector<256xf32> to vector<1x256xf32>
    %11 = vector.broadcast %10 : vector<1x256xf32> to vector<4x256xf32>
    %12 = arith.subf %4, %11 : vector<4x256xf32>
    %13 = math.exp %12 : vector<4x256xf32>
    %cst_9 = arith.constant dense<0.000000e+00> : vector<256xf32>
    %14 = vector.multi_reduction <add>, %13, %cst_9 [0] : vector<4x256xf32> to vector<256xf32>
    %15 = vector.shape_cast %14 : vector<256xf32> to vector<1x256xf32>
    %16 = math.log %15 : vector<1x256xf32>
    %17 = arith.addf %10, %16 : vector<1x256xf32>
    %18 = tpu.iota {dimensions = array<i32: 0>} : vector<4x1xi32>
    %19 = vector.broadcast %18 : vector<4x1xi32> to vector<4x256xi32>
    %20 = vector.broadcast %6 : vector<1x256xi32> to vector<4x256xi32>
    %21 = arith.cmpi eq, %19, %20 : vector<4x256xi32>
    %cst_10 = arith.constant 0.000000e+00 : f32
    %22 = vector.broadcast %cst_10 : f32 to vector<4x256xf32>
    %23 = arith.select %21, %4, %22 : vector<4x256xi1>, vector<4x256xf32>
    %cst_11 = arith.constant dense<0.000000e+00> : vector<256xf32>
    %24 = vector.multi_reduction <add>, %23, %cst_11 [0] : vector<4x256xf32> to vector<256xf32>
    %25 = vector.shape_cast %24 : vector<256xf32> to vector<1x256xf32>
    %c0_12 = arith.constant 0 : index
    %c0_13 = arith.constant 0 : index
    %26 = vector.load %arg7[%c0_12, %c0_13] : memref<1x256xf32, #tpu.memory_space<vmem>>, vector<1x256xf32>
    %27 = arith.subf %17, %25 : vector<1x256xf32>
    %28 = arith.mulf %27, %8 : vector<1x256xf32>
    %29 = arith.addf %26, %28 : vector<1x256xf32>
    %c0_14 = arith.constant 0 : index
    %c0_15 = arith.constant 0 : index
    %30 = vector.load %arg7[%c0_14, %c0_15] : memref<1x256xf32, #tpu.memory_space<vmem>>, vector<1x256xf32>
    tpu.vector_store %arg7[%c0_14, %c0_15], %29 {strides = array<i32>} : memref<1x256xf32, #tpu.memory_space<vmem>>, vector<1x256xf32>,
    %c0_i32_16 = arith.constant 0 : i32
    %31 = arith.cmpi eq, %arg2, %c0_i32_16 : i32
    %32 = arith.extui %31 : i1 to i32
    %c0_i32_17 = arith.constant 0 : i32
    %33 = arith.cmpi ne, %32, %c0_i32_17 : i32
    scf.if %33 {
      %c0_18 = arith.constant 0 : index
      %c0_19 = arith.constant 0 : index
      %34 = vector.load %arg7[%c0_18, %c0_19] : memref<1x256xf32, #tpu.memory_space<vmem>>, vector<1x256xf32>
      %cst_20 = arith.constant dense<0.000000e+00> : vector<1xf32>
      %35 = vector.multi_reduction <add>, %34, %cst_20 [1] : vector<1x256xf32> to vector<1xf32>
      %36 = vector.shape_cast %35 : vector<1xf32> to vector<1x1xf32>
      %cst_21 = arith.constant 0.001953125 : f32
      %37 = vector.broadcast %cst_21 : f32 to vector<1x1xf32>
      %38 = arith.mulf %36, %37 : vector<1x1xf32>
      %39 = vector.shape_cast %38 : vector<1x1xf32> to vector<1x1x1x1xf32>
      %c0_22 = arith.constant 0 : index
      %c0_23 = arith.constant 0 : index
      %c0_24 = arith.constant 0 : index
      %c0_25 = arith.constant 0 : index
      %40 = vector.load %arg6[%c0_22, %c0_23, %c0_24, %c0_25] : memref<1x1x1x1xf32, #tpu.memory_space<vmem>>, vector<1x1x1x1xf32>
      tpu.vector_store %arg6[%c0_22, %c0_23, %c0_24, %c0_25], %39 {strides = array<i32>} : memref<1x1x1x1xf32, #tpu.memory_space<vmem>>, vector<1x1x1x1xf32>,
    } else {
    }
    return
  }
  func.func @transform_0(%arg0: i32, %arg1: i32, %arg2: i32) -> (i32, i32, i32) {
    %c1_i32 = arith.constant 1 : i32
    %0 = arith.muli %arg1, %c1_i32 : i32
    %1 = arith.addi %0, %arg2 : i32
    %c0_i32 = arith.constant 0 : i32
    %c0_i32_0 = arith.constant 0 : i32
    return %arg0, %c0_i32, %1 : i32, i32, i32
  }
  func.func @transform_1(%arg0: i32, %arg1: i32, %arg2: i32) -> (i32, i32, i32) {
    %c1_i32 = arith.constant 1 : i32
    %0 = arith.muli %arg1, %c1_i32 : i32
    %1 = arith.addi %0, %arg2 : i32
    %c0_i32 = arith.constant 0 : i32
    %c0_i32_0 = arith.constant 0 : i32
    return %arg0, %c0_i32, %1 : i32, i32, i32
  }
  func.func @transform_2(%arg0: i32, %arg1: i32, %arg2: i32) -> (i32, i32, i32) {
    %c1_i32 = arith.constant 1 : i32
    %0 = arith.muli %arg1, %c1_i32 : i32
    %1 = arith.addi %0, %arg2 : i32
    %c0_i32 = arith.constant 0 : i32
    %c0_i32_0 = arith.constant 0 : i32
    return %arg0, %c0_i32, %1 : i32, i32, i32
  }
  func.func @transform_3(%arg0: i32, %arg1: i32, %arg2: i32) -> (i32, i32, i32, i32) {
    %c0_i32 = arith.constant 0 : i32
    %c0_i32_0 = arith.constant 0 : i32
    %c0_i32_1 = arith.constant 0 : i32
    return %arg0, %arg1, %c0_i32, %c0_i32_0 : i32, i32, i32, i32
  }
}

</mosaic_0001>

<llo_original>
// kernel: tpu_custom_call.1
$region0: #{tpu_custom_call.1}
  #allocation0 [shape = 'u32[]', space=smem, size = 0x4, offset = 0x4, fixed_abs, tag = 'smem constant byte address 0x4 - core index']
  #allocation1 [shape = 'u32[72,128]{1,0:T(1,128)}', space=vmem, size = 0x9000, scoped, tag = 'internal scratch']
  #allocation2 [shape = 'f32[1,256]{1,0:T(1,128)}', space=vmem, size = 0x400, scoped, tag = 'scratch operand']
  %s0 = inlined_call_operand.hbm [shape: f32[2,4,256], index: 0, kind: input, shape index: {}]
  %s1 = inlined_call_operand.hbm [shape: s32[2,1,256], index: 1, kind: input, shape index: {}]
  %s2 = inlined_call_operand.hbm [shape: f32[2,1,256], index: 2, kind: input, shape index: {}]
  %s3 = inlined_call_operand.vmem [shape: f32[2,1,1,1], index: 3, kind: output, shape index: {}]
  %s4 = sld [smem:[#allocation0]]
  $region65: #{tpu_custom_call.1} parent=0
    _
  %s6 = ssub.s32 1, %s4
  %s7 = scalar_select 0, %s6, %s4
  $region1: #{tpu_custom_call.1} parent=0
    #allocation3 [shape = 'u8[8192]{0}', space=vmem, size = 0x2000, scoped, tag = 'input window, operand 0']
    #allocation4 [shape = 's32[2]{0}', space=sflag, size = 0x8, scoped, tag = 'scoped memory for tpu_custom_call.1']
    #allocation5 [shape = 'u8[2048]{0}', space=vmem, size = 0x800, scoped, tag = 'input window, operand 1']
    #allocation6 [shape = 's32[2]{0}', space=sflag, size = 0x8, scoped, tag = 'scoped memory for tpu_custom_call.1']
    #allocation7 [shape = 'u8[2048]{0}', space=vmem, size = 0x800, scoped, tag = 'input window, operand 2']
    %8 = vsyncpa [#allocation4], 0
    %s9 = scalar_lea.sflag [#allocation4], 1
    %10 = vsyncpa %s9, 0
    %11 = vsyncpa [#allocation6], 0
    %s12 = scalar_lea.sflag [#allocation6], 1
    %13 = vsyncpa %s12, 0
    loop: start=0, step=1, limit=4
    $region2: #{tpu_custom_call.1} parent=1 // loop_pre_header
      _
    $region3: #{tpu_custom_call.1} parent=1 // loop_header
      %s15 = sphi 0, %s19
      %p16 = scmp.ge.s32.totalorder %s15, 4
      %s22 = sphi 0, %s41
      %s23 = sphi 0, %s37
      %s24 = sphi 0, %s33
      %s25 = sphi 0, %s22
      %s26 = sphi 0, %s23
      %s27 = sphi 0, %s24
      %s28 = sphi 0, %s25
      %s29 = sphi 0, %s26
      %s30 = sphi 0, %s27
      %s48 = sphi 0, %s50
      %s51 = sphi 0, %s48
      %s52 = sphi 0, %s51
      %s68 = sphi 0, %s52
      %s78 = sphi 0, %s80
      %s81 = sphi 0, %s78
      %s82 = sphi 0, %s81
      %s98 = sphi 0, %s82
      %s108 = sphi 0, %s110
      %s111 = sphi 0, %s108
      %s112 = sphi 0, %s111
      %s128 = sphi 0, %s112
      %s136 = sphi 0, %s138
      %s139 = sphi 0, %s136
      %s140 = sphi 0, %s139
      %s156 = sphi 0, %s140
    $region4: #{tpu_custom_call.1} parent=1 // loop_header_branch
      %18 = sbr.rel (%p16) target = $region8
    $region5: #{tpu_custom_call.1} parent=1 // loop_body
      %s20 = ssub.s32 %s15, 1
      %s21 = ssub.s32 %s15, 2
      %s31 = sadd.s32 1, %s24
      %p32 = scmp.ge.s32.totalorder %s31, 1
      %s33 = scalar_select %p32, 0, %s31
      %s34 = sadd.s32 1, %s23
      %s35 = scalar_select %p32, %s34, %s23
      %p36 = scmp.ge.s32.totalorder %s35, 1
      %s37 = scalar_select %p36, 0, %s35
      %s38 = sadd.s32 1, %s22
      %s39 = scalar_select %p36, %s38, %s22
      %p40 = scmp.ge.s32.totalorder %s39, 2
      %s41 = scalar_select %p40, 0, %s39
      %s42 = sadd.s32 %s23, %s24
      %s43 = sadd.s32 %s37, %s33
      %s44 = ssub.s32 %s22, %s41
      %s45 = ssub.s32 %s42, %s43
      %s46 = sor.u32 %s44, %s45
      %p47 = scmp.eq.s32.totalorder %s46, 0
      %s49 = sadd.s32 %s48, 1
      %s50 = scalar_select %p47, %s48, %s49
      %p53 = pneg %p47
      %p54 = scmp.eq.s32.totalorder %s15, 1
      %p55 = por %p53, %p54
      %p56 = scmp.ne.s32.totalorder %s48, %s51
      %p57 = scmp.eq.s32.totalorder %s15, 0
      %p58 = por %p56, %p57
      %p59 = scmp.ne.s32.totalorder %s48, %s51
      %p60 = scmp.eq.s32.totalorder %s20, 1
      %p61 = por %p59, %p60
      %p62 = scmp.ne.s32.totalorder %s51, %s52
      %p63 = scmp.eq.s32.totalorder %s20, 0
      %p64 = por %p62, %p63
      %p65 = scmp.ne.s32.totalorder %s51, %s52
      %p66 = scmp.eq.s32.totalorder %s21, 1
      %p67 = por %p65, %p66
      %p69 = scmp.ne.s32.totalorder %s52, %s68
      %p70 = scmp.eq.s32.totalorder %s21, 0
      %p71 = por %p69, %p70
      %s72 = sadd.s32 %s23, %s24
      %s73 = sadd.s32 %s37, %s33
      %s74 = ssub.s32 %s22, %s41
      %s75 = ssub.s32 %s72, %s73
      %s76 = sor.u32 %s74, %s75
      %p77 = scmp.eq.s32.totalorder %s76, 0
      %s79 = sadd.s32 %s78, 1
      %s80 = scalar_select %p77, %s78, %s79
      %p83 = pneg %p77
      %p84 = scmp.eq.s32.totalorder %s15, 1
      %p85 = por %p83, %p84
      %p86 = scmp.ne.s32.totalorder %s78, %s81
      %p87 = scmp.eq.s32.totalorder %s15, 0
      %p88 = por %p86, %p87
      %p89 = scmp.ne.s32.totalorder %s78, %s81
      %p90 = scmp.eq.s32.totalorder %s20, 1
      %p91 = por %p89, %p90
      %p92 = scmp.ne.s32.totalorder %s81, %s82
      %p93 = scmp.eq.s32.totalorder %s20, 0
      %p94 = por %p92, %p93
      %p95 = scmp.ne.s32.totalorder %s81, %s82
      %p96 = scmp.eq.s32.totalorder %s21, 1
      %p97 = por %p95, %p96
      %p99 = scmp.ne.s32.totalorder %s82, %s98
      %p100 = scmp.eq.s32.totalorder %s21, 0
      %p101 = por %p99, %p100
      %s102 = sadd.s32 %s23, %s24
      %s103 = sadd.s32 %s37, %s33
      %s104 = ssub.s32 %s22, %s41
      %s105 = ssub.s32 %s102, %s103
      %s106 = sor.u32 %s104, %s105
      %p107 = scmp.eq.s32.totalorder %s106, 0
      %s109 = sadd.s32 %s108, 1
      %s110 = scalar_select %p107, %s108, %s109
      %p113 = pneg %p107
      %p114 = scmp.eq.s32.totalorder %s15, 1
      %p115 = por %p113, %p114
      %p116 = scmp.ne.s32.totalorder %s108, %s111
      %p117 = scmp.eq.s32.totalorder %s15, 0
      %p118 = por %p116, %p117
      %p119 = scmp.ne.s32.totalorder %s108, %s111
      %p120 = scmp.eq.s32.totalorder %s20, 1
      %p121 = por %p119, %p120
      %p122 = scmp.ne.s32.totalorder %s111, %s112
      %p123 = scmp.eq.s32.totalorder %s20, 0
      %p124 = por %p122, %p123
      %p125 = scmp.ne.s32.totalorder %s111, %s112
      %p126 = scmp.eq.s32.totalorder %s21, 1
      %p127 = por %p125, %p126
      %p129 = scmp.ne.s32.totalorder %s112, %s128
      %p130 = scmp.eq.s32.totalorder %s21, 0
      %p131 = por %p129, %p130
      %s132 = ssub.s32 %s22, %s41
      %s133 = ssub.s32 %s23, %s37
      %s134 = sor.u32 %s132, %s133
      %p135 = scmp.eq.s32.totalorder %s134, 0
      %s137 = sadd.s32 %s136, 1
      %s138 = scalar_select %p135, %s136, %s137
      %p141 = pneg %p135
      %p142 = scmp.eq.s32.totalorder %s15, 1
      %p143 = por %p141, %p142
      %p144 = scmp.ne.s32.totalorder %s136, %s139
      %p145 = scmp.eq.s32.totalorder %s15, 0
      %p146 = por %p144, %p145
      %p147 = scmp.ne.s32.totalorder %s136, %s139
      %p148 = scmp.eq.s32.totalorder %s20, 1
      %p149 = por %p147, %p148
      %p150 = scmp.ne.s32.totalorder %s139, %s140
      %p151 = scmp.eq.s32.totalorder %s20, 0
      %p152 = por %p150, %p151
      %p153 = scmp.ne.s32.totalorder %s139, %s140
      %p154 = scmp.eq.s32.totalorder %s21, 1
      %p155 = por %p153, %p154
      %p157 = scmp.ne.s32.totalorder %s140, %s156
      %p158 = scmp.eq.s32.totalorder %s21, 0
      %p159 = por %p157, %p158
      %p160 = scmp.le.s32.totalorder 1, %s15
      %p161 = scmp.lt.s32.totalorder %s15, 3
      %p162 = pnand %p160, %p161
      %p163 = pneg %p162
      // Predicated region
      $region9: #{tpu_custom_call.1} parent=5 // pred_check
        _
      $region10: #{tpu_custom_call.1} parent=5 // pred_check_branch
        %165 = sbr.rel (%p162) target = $region12
      $region11: #{tpu_custom_call.1} parent=5 // pred_region
        %s166 = ssub.s32 %s15, 1
      $region12: #{tpu_custom_call.1} parent=5 // pred_fallthru
        _
      %p167 = scmp.lt.s32.totalorder %s15, 2
      // Predicated region
      $region13: #{tpu_custom_call.1} parent=5 // pred_check
        %p168 = pneg %p167
      $region14: #{tpu_custom_call.1} parent=5 // pred_check_branch
        %170 = sbr.rel (%p168) target = $region16
      $region15: #{tpu_custom_call.1} parent=5 // pred_region
        // Predicated region
        $region17: #{tpu_custom_call.1} parent=15 // pred_check
          %p171 = pneg %p58
        $region18: #{tpu_custom_call.1} parent=15 // pred_check_branch
          %173 = sbr.rel (%p171) target = $region20
        $region19: #{tpu_custom_call.1} parent=15 // pred_region
          %s174 = sand.u32 %s48, 1
          %s175 = scalar_lea.sflag [#allocation4], %s174
          %s176 = sand.u32 %s48, 1
          %s177 = smul.addr %s176, 8
          %s178 = scalar_lea.vmem [#allocation3], %s177
          %s179 = sadd.s32 %s23, %s24
          %s180 = smul.u32 2, %s179
          %182 = vsyncadd %s175, 0
          %s183 = smul.addr %s22, 2
          %s184 = sadd.s32 %s180, %s183
          %s185 = smul.addr %s184, 4
          %s186 = scalar_lea.hbm %s0, %s185
          %s188 = sshll.u32 %s186, 4
          %s189 = int_to_ptr.hbm [resolvable:$true] %s188
          %s190 = sshll.u32 %s178, 4
          %s191 = int_to_ptr.vmem [resolvable:$true] %s190
          %193 = dma.hbm_to_vmem [thread:$0]  %s189, 128, %s191, %s175
        $region20: #{tpu_custom_call.1} parent=15 // pred_fallthru
          _
        // Predicated region
        $region21: #{tpu_custom_call.1} parent=15 // pred_check
          %p194 = pneg %p88
        $region22: #{tpu_custom_call.1} parent=15 // pred_check_branch
          %196 = sbr.rel (%p194) target = $region24
        $region23: #{tpu_custom_call.1} parent=15 // pred_region
          %s197 = sand.u32 %s15, 1
          %s198 = scalar_lea.sflag [#allocation6], %s197
          %s199 = sand.u32 %s78, 1
          %s200 = smul.addr %s199, 2
          %s201 = scalar_lea.vmem [#allocation5], %s200
          %s202 = sadd.s32 %s23, %s24
          %s203 = smul.u32 2, %s202
          %205 = vsyncadd %s198, 0
          %s206 = smul.addr %s22, 2
          %s207 = sadd.s32 %s203, %s206
          %s208 = scalar_lea.hbm %s1, %s207
          %s210 = sshll.u32 %s208, 4
          %s211 = int_to_ptr.hbm [resolvable:$true] %s210
          %s212 = sshll.u32 %s201, 4
          %s213 = int_to_ptr.vmem [resolvable:$true] %s212
          %215 = dma.hbm_to_vmem [thread:$0]  %s211, 32, %s213, %s198
        $region24: #{tpu_custom_call.1} parent=15 // pred_fallthru
          _
        // Predicated region
        $region25: #{tpu_custom_call.1} parent=15 // pred_check
          %p216 = pneg %p118
        $region26: #{tpu_custom_call.1} parent=15 // pred_check_branch
          %218 = sbr.rel (%p216) target = $region28
        $region27: #{tpu_custom_call.1} parent=15 // pred_region
          %s219 = sand.u32 %s15, 1
          %s220 = scalar_lea.sflag [#allocation6], %s219
          %s221 = sand.u32 %s108, 1
          %s222 = smul.addr %s221, 2
          %s223 = scalar_lea.vmem [#allocation7], %s222
          %s224 = sadd.s32 %s23, %s24
          %s225 = smul.u32 2, %s224
          %227 = vsyncadd %s220, 0
          %s228 = smul.addr %s22, 2
          %s229 = sadd.s32 %s225, %s228
          %s230 = scalar_lea.hbm %s2, %s229
          %s232 = sshll.u32 %s230, 4
          %s233 = int_to_ptr.hbm [resolvable:$true] %s232
          %s234 = sshll.u32 %s223, 4
          %s235 = int_to_ptr.vmem [resolvable:$true] %s234
          %237 = dma.hbm_to_vmem [thread:$0]  %s233, 32, %s235, %s220
        $region28: #{tpu_custom_call.1} parent=15 // pred_fallthru
          _
      $region16: #{tpu_custom_call.1} parent=5 // pred_fallthru
        _
      %p238 = scmp.le.s32.totalorder 1, %s15
      %p239 = scmp.lt.s32.totalorder %s15, 3
      %p240 = pnand %p238, %p239
      %p241 = pneg %p240
      // Predicated region
      $region29: #{tpu_custom_call.1} parent=5 // pred_check
        _
      $region30: #{tpu_custom_call.1} parent=5 // pred_check_branch
        %243 = sbr.rel (%p240) target = $region32
      $region31: #{tpu_custom_call.1} parent=5 // pred_region
        %s244 = ssub.s32 %s15, 1
        %s245 = sand.u32 %s51, 1
        %s246 = scalar_lea.sflag [#allocation4], %s245
        %s247 = sand.u32 %s51, 1
        %s248 = smul.addr %s247, 8
        %s249 = scalar_lea.vmem [#allocation3], %s248
        // Predicated region
        $region33: #{tpu_custom_call.1} parent=31 // pred_check
          %p250 = pneg %p64
        $region34: #{tpu_custom_call.1} parent=31 // pred_check_branch
          %252 = sbr.rel (%p250) target = $region36
        $region35: #{tpu_custom_call.1} parent=31 // pred_region
          %254 = dma.done %s246, 128
        $region36: #{tpu_custom_call.1} parent=31 // pred_fallthru
          _
        %s255 = sand.u32 %s20, 1
        %s256 = scalar_lea.sflag [#allocation6], %s255
        %s257 = sand.u32 %s81, 1
        %s258 = smul.addr %s257, 2
        %s259 = scalar_lea.vmem [#allocation5], %s258
        // Predicated region
        $region37: #{tpu_custom_call.1} parent=31 // pred_check
          %p260 = pneg %p94
        $region38: #{tpu_custom_call.1} parent=31 // pred_check_branch
          %262 = sbr.rel (%p260) target = $region40
        $region39: #{tpu_custom_call.1} parent=31 // pred_region
          %264 = dma.done %s256, 32
        $region40: #{tpu_custom_call.1} parent=31 // pred_fallthru
          _
        %s265 = sand.u32 %s20, 1
        %s266 = scalar_lea.sflag [#allocation6], %s265
        %s267 = sand.u32 %s111, 1
        %s268 = smul.addr %s267, 2
        %s269 = scalar_lea.vmem [#allocation7], %s268
        // Predicated region
        $region41: #{tpu_custom_call.1} parent=31 // pred_check
          %p270 = pneg %p124
        $region42: #{tpu_custom_call.1} parent=31 // pred_check_branch
          %272 = sbr.rel (%p270) target = $region44
        $region43: #{tpu_custom_call.1} parent=31 // pred_region
          %274 = dma.done %s266, 32
        $region44: #{tpu_custom_call.1} parent=31 // pred_fallthru
          _
        %s275 = sand.u32 %s51, 1
        %s276 = scalar_lea.sflag [#allocation4], %s275
        %s277 = sand.u32 %s51, 1
        %s278 = smul.addr %s277, 8
        %s279 = scalar_lea.vmem [#allocation3], %s278
        %p280 = pneg %p64
        %p281 = pneg %p61
        %s282 = sand.u32 %s20, 1
        %s283 = scalar_lea.sflag [#allocation6], %s282
        %s284 = sand.u32 %s81, 1
        %s285 = smul.addr %s284, 2
        %s286 = scalar_lea.vmem [#allocation5], %s285
        %p287 = pneg %p94
        %p288 = pneg %p91
        %s289 = sand.u32 %s20, 1
        %s290 = scalar_lea.sflag [#allocation6], %s289
        %s291 = sand.u32 %s111, 1
        %s292 = smul.addr %s291, 2
        %s293 = scalar_lea.vmem [#allocation7], %s292
        %p294 = pneg %p124
        %p295 = pneg %p121
        %p296 = pneg %p152
        %p297 = pneg %p149
        %p298 = scmp.lt.s32.totalorder %s25, 1
        %s299 = scalar_select %p298, %s25, 1
        %p300 = scmp.lt.s32.totalorder %s26, 0
        %s301 = scalar_select %p300, %s26, 0
        %s302 = sadd.s32 %s301, %s299
        %s303 = scalar_lea.vmem %s3, %s302
        %s304 = sadd.s32 %s26, %s27
        %s305 = smul.u32 2, %s304
        %s306 = sadd.s32 %s26, %s27
        %s307 = smul.u32 2, %s306
        %s308 = sadd.s32 %s26, %s27
        %s309 = smul.u32 2, %s308
        %p310 = scmp.lt.s32.totalorder %s25, 1
        %s311 = scalar_select %p310, %s25, 1
        %p312 = scmp.lt.s32.totalorder %s26, 0
        %s313 = scalar_select %p312, %s26, 0
        %s314 = sadd.s32 %s313, %s311
        %s315 = scalar_lea.vmem %s3, %s314
        %p316 = scmp.eq.s32.totalorder %s27, 0
        // Predicated region
        $region45: #{tpu_custom_call.1} parent=31 // pred_check
          %p317 = pneg %p316
        $region46: #{tpu_custom_call.1} parent=31 // pred_check_branch
          %319 = sbr.rel (%p317) target = $region48
        $region47: #{tpu_custom_call.1} parent=31 // pred_region
          %v320 = vlaneseq
          %vm321 = vcmp.ge.s32.totalorder %v320, 0
          %vm322 = vcmp.lt.s32.totalorder %v320, 256
          %vm323 = vmand %vm321, %vm322
          %324 = vst.msk [vmem:[#allocation2] sm:$0x3] %vm323, 0.0
        $region48: #{tpu_custom_call.1} parent=31 // pred_fallthru
          _
        %v325 = vld [vmem:[%s249] sm:$0xff]
        %v326 = vld [vmem:[%s259] sm:$0x3]
        %v327 = vld [vmem:[%s269] sm:$0x3]
        %329 = vst [vmem:[#allocation1] ss:$2 sm:$0xff] %v325
        %v330 = vld.sshfl [vmem:[#allocation1] sm:$0xff pattern:$0x75316420]
        %v331 = vld.sshfl [vmem:[#allocation1 + $0x8] sm:$0xff pattern:$0x75316420]
        %vm334 = vcmask 1043456
        %v335 = vsel %vm334, %v330, -inf
        %v336 = vrot.slane %v335, 4
        %v337 = vmax.f32 %v335, %v336
        %v338 = vrot.slane %v337, 2
        %v339 = vmax.f32 %v337, %v338
        %v340 = vrot.slane %v339, 1
        %v341 = vmax.f32 %v339, %v340
        %v342 = vsel %vm334, %v331, -inf
        %v343 = vrot.slane %v342, 4
        %v344 = vmax.f32 %v342, %v343
        %v345 = vrot.slane %v344, 2
        %v346 = vmax.f32 %v344, %v345
        %v347 = vrot.slane %v346, 1
        %v348 = vmax.f32 %v346, %v347
        %v351 = vrot.slane %v348, 4
        %v352 = vsel %vm334, %v341, %v351
        %v354 = vsub.f32 %v325, %v352
        %v355 = vmul.f32 %v354, 1.442695
        %v356 = vpow.pop %v355
        %358 = vst [vmem:[#allocation1] ss:$2 sm:$0xff] %v356
        %v359 = vld.sshfl [vmem:[#allocation1] sm:$0xff pattern:$0x75316420]
        %v360 = vld.sshfl [vmem:[#allocation1 + $0x8] sm:$0xff pattern:$0x75316420]
        %v363 = vsel %vm334, %v359, 0.0
        %v364 = vrot.slane %v363, 4
        %v365 = vadd.f32 %v363, %v364
        %v366 = vrot.slane %v365, 2
        %v367 = vadd.f32 %v365, %v366
        %v368 = vrot.slane %v367, 1
        %v369 = vadd.f32 %v367, %v368
        %v370 = vsel %vm334, %v360, 0.0
        %v371 = vrot.slane %v370, 4
        %v372 = vadd.f32 %v370, %v371
        %v373 = vrot.slane %v372, 2
        %v374 = vadd.f32 %v372, %v373
        %v375 = vrot.slane %v374, 1
        %v376 = vadd.f32 %v374, %v375
        %v377 = vlog2.pop %v369
        %v378 = vmul.f32 %v377, 0.6931472
        %v379 = vlog2.pop %v376
        %v380 = vmul.f32 %v379, 0.6931472
        %v381 = vadd.f32 %v341, %v378
        %v382 = vadd.f32 %v348, %v380
        %v383 = vlaneseq
        %v384 = vshrl.u32 %v383, 7
        %v385 = vperm.slane %v326, 0
        %v386 = vperm.slane %v326, 1
        %vm387 = vcmp.eq.s32.totalorder %v384, %v385
        %vm388 = vcmp.eq.s32.totalorder %v384, %v386
        %389 = vst [vmem:[#allocation1] ss:$2 sm:$0xff] %v325
        %v390 = vld.sshfl [vmem:[#allocation1] sm:$0xff pattern:$0x75316420]
        %v391 = vld.sshfl [vmem:[#allocation1 + $0x8] sm:$0xff pattern:$0x75316420]
        %v394 = vsel %vm387, %v390, 0.0
        %v395 = vsel %vm388, %v391, 0.0
        %v396 = vsel %vm334, %v394, 0.0
        %v397 = vrot.slane %v396, 4
        %v398 = vadd.f32 %v396, %v397
        %v399 = vrot.slane %v398, 2
        %v400 = vadd.f32 %v398, %v399
        %v401 = vrot.slane %v400, 1
        %v402 = vadd.f32 %v400, %v401
        %v403 = vsel %vm334, %v395, 0.0
        %v404 = vrot.slane %v403, 4
        %v405 = vadd.f32 %v403, %v404
        %v406 = vrot.slane %v405, 2
        %v407 = vadd.f32 %v405, %v406
        %v408 = vrot.slane %v407, 1
        %v409 = vadd.f32 %v407, %v408
        %v410 = vld [vmem:[#allocation2] sm:$0x3]
        %v411 = vsub.f32 %v381, %v402
        %v412 = vsub.f32 %v382, %v409
        %v414 = vperm.slane %v327, 0
        %v415 = vperm.slane %v327, 1
        %v418 = vmul.f32 %v411, %v414
        %v419 = vmul.f32 %v412, %v415
        %v422 = vrot.slane %v419, 7
        %vm423 = vcmask 1040384
        %v424 = vsel %vm423, %v418, %v422
        %v426 = vadd.f32 %v410, %v424
        %v427 = vlaneseq
        %vm428 = vcmp.ge.s32.totalorder %v427, 0
        %vm429 = vcmp.lt.s32.totalorder %v427, 256
        %vm430 = vmand %vm428, %vm429
        %431 = vst.msk [vmem:[#allocation2] sm:$0x3] %vm430, %v426
        // Predicated region
        $region49: #{tpu_custom_call.1} parent=31 // pred_check
          %p432 = pneg %p316
        $region50: #{tpu_custom_call.1} parent=31 // pred_check_branch
          %434 = sbr.rel (%p432) target = $region52
        $region51: #{tpu_custom_call.1} parent=31 // pred_region
          %v435 = vld [vmem:[#allocation2] sm:$0x3]
          %v437 = vperm.slane %v435, 0
          %v438 = vperm.slane %v435, 1
          %v441 = vsel %vm423, %v437, 0.0
          %v442 = vsel %vm423, %v438, 0.0
          %v443 = vadd.f32 %v441, %v442
          %444 = vadd.xlane.f32.xlu0 %v443
          %v445 = vpop.xlane.xlu0 %444
          %v446 = vmul.f32 %v445, 0.001953125
          %vm447 = vcmask 0
          %448 = vst.msk [vmem:[%s315] sm:$0x1] %vm447, %v446
        $region52: #{tpu_custom_call.1} parent=31 // pred_fallthru
          _
        %p449 = scmp.lt.s32.totalorder %s25, 1
        %s450 = scalar_select %p449, %s25, 1
        %p451 = scmp.lt.s32.totalorder %s26, 0
        %s452 = scalar_select %p451, %s26, 0
        %s453 = sadd.s32 %s452, %s450
        %s454 = scalar_lea.vmem %s3, %s453
        // Predicated region
        $region53: #{tpu_custom_call.1} parent=31 // pred_check
          %p455 = pneg %p149
        $region54: #{tpu_custom_call.1} parent=31 // pred_check_branch
          %457 = sbr.rel (%p455) target = $region56
        $region55: #{tpu_custom_call.1} parent=31 // pred_region
          _
        $region56: #{tpu_custom_call.1} parent=31 // pred_fallthru
          _
      $region32: #{tpu_custom_call.1} parent=5 // pred_fallthru
        _
      %p458 = scmp.le.s32.totalorder 2, %s15
      // Predicated region
      $region57: #{tpu_custom_call.1} parent=5 // pred_check
        %p459 = pneg %p458
      $region58: #{tpu_custom_call.1} parent=5 // pred_check_branch
        %461 = sbr.rel (%p459) target = $region60
      $region59: #{tpu_custom_call.1} parent=5 // pred_region
        %s462 = ssub.s32 %s15, 2
        // Predicated region
        $region61: #{tpu_custom_call.1} parent=59 // pred_check
          %p463 = pneg %p155
        $region62: #{tpu_custom_call.1} parent=59 // pred_check_branch
          %465 = sbr.rel (%p463) target = $region64
        $region63: #{tpu_custom_call.1} parent=59 // pred_region
          %p466 = scmp.lt.s32.totalorder %s28, 1
          %s467 = scalar_select %p466, %s28, 1
          %p468 = scmp.lt.s32.totalorder %s29, 0
          %s469 = scalar_select %p468, %s29, 0
          %s470 = sadd.s32 %s469, %s467
          %s471 = scalar_lea.vmem %s3, %s470
        $region64: #{tpu_custom_call.1} parent=59 // pred_fallthru
          _
      $region60: #{tpu_custom_call.1} parent=5 // pred_fallthru
        _
    $region6: #{tpu_custom_call.1} parent=1 // loop_footer
      %s19 = sadd.s32 1, %s15
    $region7: #{tpu_custom_call.1} parent=1 // loop_footer_branch
      %14 = sbr.rel target = $region3
    $region8: #{tpu_custom_call.1} parent=1 // loop_exit
      _
    %472 = vsyncpa [#allocation4], 1
    %s473 = scalar_lea.sflag [#allocation4], 1
    %474 = vsyncpa %s473, 1
    %475 = vsyncpa [#allocation6], 1
    %s476 = scalar_lea.sflag [#allocation6], 1
    %477 = vsyncpa %s476, 1

</llo_original>
